<compile_context>
chip_gen: v5e
topology: v5e:2x2
jax: 0.10.0
libtpu: 0.0.40
codegen_flags: <defaults>
</compile_context>

<pallas_src>
import functools

import jax
import jax.numpy as jnp
from jax.experimental import pallas as pl
from jax.experimental.pallas import tpu as pltpu

_LANES = 128


def _adatanh_kernel(alpha_ref, x_ref, o_ref, *, compute_dtype):
    # alpha_ref: SMEM scalar (scalar-prefetch arg); x_ref / o_ref: VMEM tiles.
    a = alpha_ref[0].astype(compute_dtype)
    x = x_ref[...].astype(compute_dtype)           # no-op when dtypes match
    o_ref[...] = jnp.tanh(a * x).astype(o_ref.dtype)


def _device_kind():
    try:
        return jax.devices()[0].device_kind.lower()
    except Exception:
        return ""


def _default_tile_rows(itemsize, kind):
    # Per-generation caps (f32 baseline); double-buffered in+out = 4x tile bytes.
    if "v5" in kind:                  # 16 MiB default scoped VMEM, ~820 GB/s HBM
        rows = 2048
    elif "v7" in kind or "7x" in kind:  # 3.2 TB/s HBM -> biggest tile that fits
        rows = 8192
    else:                             # v6e / unknown
        rows = 4096
    if itemsize < 4:                  # bf16 / int8 rows are half/quarter the bytes
        rows *= 2
    return rows


def adatanh(x, alpha, *, tile_rows=None):
    """Apply AdaTanh (tanh(alpha * x)) elementwise. x: any-shape float array."""
    orig_shape = x.shape
    dtype = x.dtype
    n = x.size
    itemsize = jnp.dtype(dtype).itemsize
    kind = _device_kind()

    # Sublane granularity depends on element packing: f32->8, bf16->16, 8-bit->32.
    sublane_mult = {4: 8, 2: 16, 1: 32}.get(itemsize, 8)

    # bf16 EUP exists on v6e/v7x; v5e needs the f32 upcast.
    if dtype == jnp.bfloat16 and "v5" not in kind:
        compute_dtype = jnp.bfloat16
    else:
        compute_dtype = jnp.float32

    rows = pl.cdiv(n, _LANES)
    padded_n = rows * _LANES

    if tile_rows is None:
        tile_rows = _default_tile_rows(itemsize, kind)
    tile_rows = max(sublane_mult, (tile_rows // sublane_mult) * sublane_mult)
    if rows <= tile_rows:
        # Small input: a single block covers everything (grid of 1).
        tile_rows = pl.cdiv(rows, sublane_mult) * sublane_mult

    # Layout-only reshape for contiguous x; pad at most 127 elements (only when
    # the element count is not a multiple of 128).
    x_flat = jnp.ravel(x)
    if padded_n != n:
        x_flat = jnp.pad(x_flat, (0, padded_n - n))
    x2d = x_flat.reshape(rows, _LANES)

    alpha_arr = jnp.asarray(alpha, dtype=jnp.float32).reshape(1)

    grid = (pl.cdiv(rows, tile_rows),)   # ragged final block handled by Pallas

    kernel = functools.partial(_adatanh_kernel, compute_dtype=compute_dtype)

    out2d = pl.pallas_call(
        kernel,
        out_shape=jax.ShapeDtypeStruct((rows, _LANES), dtype),
        grid_spec=pltpu.PrefetchScalarGridSpec(
            num_scalar_prefetch=1,       # alpha -> SMEM, read once per tile
            grid=grid,
            in_specs=[
                pl.BlockSpec((tile_rows, _LANES), lambda i, alpha: (i, 0)),
            ],
            out_specs=pl.BlockSpec((tile_rows, _LANES), lambda i, alpha: (i, 0)),
        ),
        compiler_params=pltpu.CompilerParams(
            dimension_semantics=("parallel",),
        ),
        cost_estimate=pl.CostEstimate(
            flops=padded_n,
            transcendentals=padded_n,
            bytes_accessed=2 * padded_n * itemsize,
        ),
    )(alpha_arr, x2d)

    if padded_n == n:
        out = out2d.reshape(orig_shape)
    else:
        out = out2d.reshape(-1)[:n].reshape(orig_shape)
    return out


if __name__ == "__main__":
    key = jax.random.PRNGKey(0)
    # Input shape consistent with an NCHW conv-style activation input.
    x = jax.random.normal(key, (2, 4, 16, 16), dtype=jnp.float32)

    # Deterministic parameter init, matching nn.Parameter(torch.tensor(alpha)).
    alpha = jnp.float32(1.0)

    out = adatanh(x, alpha)
    out = jax.block_until_ready(out)

    # Reference: the module's literal formula (== tanh(alpha*x) where it does
    # not overflow) and the stable tanh form.
    ref_formula = (jnp.exp(alpha * x) - jnp.exp(-alpha * x)) / (
        jnp.exp(alpha * x) + jnp.exp(-alpha * x)
    )
    ref_tanh = jnp.tanh(alpha * x)

    assert out.shape == x.shape and out.dtype == x.dtype
    assert jnp.max(jnp.abs(out - ref_tanh)) < 1e-5
    assert jnp.max(jnp.abs(out - ref_formula)) < 1e-5

    print("KERNEL_OK")
</pallas_src>

<mosaic_0001>
module attributes {stable_mosaic.version = 11 : i64} {
  func.func @_adatanh_kernel(%arg0: i32, %arg1: memref<1xf32, #tpu.memory_space<smem>>, %arg2: memref<16x128xf32, #tpu.memory_space<vmem>>, %arg3: memref<16x128xf32, #tpu.memory_space<vmem>>) attributes {dimension_semantics = [#tpu.dimension_semantics<parallel>], iteration_bounds = array<i64: 1>, scalar_prefetch = 1 : i64, scratch_operands = 0 : i64, tpu.core_type = #tpu.core_type<tc>, window_params = [{transform_indices = @transform_0, window_bounds = array<i64: 16, 128>}, {transform_indices = @transform_1, window_bounds = array<i64: 16, 128>}]} {
    %c0 = arith.constant 0 : index
    %0 = memref.load %arg1[%c0] : memref<1xf32, #tpu.memory_space<smem>>
    %c0_0 = arith.constant 0 : index
    %c0_1 = arith.constant 0 : index
    %1 = vector.load %arg2[%c0_0, %c0_1] : memref<16x128xf32, #tpu.memory_space<vmem>>, vector<16x128xf32>
    %2 = vector.broadcast %0 : f32 to vector<16x128xf32>
    %3 = arith.mulf %2, %1 : vector<16x128xf32>
    %4 = math.tanh %3 : vector<16x128xf32>
    %c0_2 = arith.constant 0 : index
    %c0_3 = arith.constant 0 : index
    %5 = vector.load %arg3[%c0_2, %c0_3] : memref<16x128xf32, #tpu.memory_space<vmem>>, vector<16x128xf32>
    tpu.vector_store %arg3[%c0_2, %c0_3], %4 {strides = array<i32>} : memref<16x128xf32, #tpu.memory_space<vmem>>, vector<16x128xf32>,
    return
  }
  func.func @transform_0(%arg0: i32, %arg1: memref<1xf32, #tpu.memory_space<smem>>) -> (i32, i32) {
    %c0_i32 = arith.constant 0 : i32
    %c0_i32_0 = arith.constant 0 : i32
    return %arg0, %c0_i32 : i32, i32
  }
  func.func @transform_1(%arg0: i32, %arg1: memref<1xf32, #tpu.memory_space<smem>>) -> (i32, i32) {
    %c0_i32 = arith.constant 0 : i32
    %c0_i32_0 = arith.constant 0 : i32
    return %arg0, %c0_i32 : i32, i32
  }
}

</mosaic_0001>

<llo_original>
// kernel: tpu_custom_call.1
$region0: #{tpu_custom_call.1}
  #allocation0 [shape = 'u32[]', space=smem, size = 0x4, offset = 0x4, fixed_abs, tag = 'smem constant byte address 0x4 - core index']
  #allocation1 [shape = 'u32[72,128]{1,0:T(1,128)}', space=vmem, size = 0x9000, scoped, tag = 'internal scratch']
  #allocation2 [shape = 's32[1]{0}', space=sflag, size = 0x4, scoped, tag = 'scoped memory for tpu_custom_call.1']
  #allocation3 [shape = 'f32[1]{0:T(128)S(6)}', space=smem, size = 0x200, scoped, tag = 'prefetched SMEM operand 0']
  %s0 = inlined_call_operand.<no memory space> [shape: f32[1], index: 0, kind: input, shape index: {}]
  %s1 = inlined_call_operand.hbm [shape: f32[16,128], index: 1, kind: input, shape index: {}]
  %s2 = inlined_call_operand.hbm [shape: f32[16,128], index: 2, kind: output, shape index: {}]
  %s3 = sld [smem:[#allocation0]]
  $region18: #{tpu_custom_call.1} parent=0
    _
  %s5 = ssub.s32 1, %s3
  %s6 = scalar_select 0, %s5, %s3
  %7 = sst [smem:[#allocation3]] %s0
  $region1: #{tpu_custom_call.1} parent=0
    #allocation4 [shape = 'u8[8192]{0}', space=vmem, size = 0x2000, scoped, tag = 'input window, operand 1, single buffered']
    #allocation5 [shape = 's32[1]{0}', space=sflag, size = 0x4, scoped, tag = 'scoped memory for tpu_custom_call.1']
    #allocation6 [shape = 's32[1]{0}', space=sflag, size = 0x4, scoped, tag = 'scoped memory for tpu_custom_call.1']
    #allocation7 [shape = 'u8[8192]{0}', space=vmem, size = 0x2000, scoped, tag = 'output window, operand 0, single buffered']
    %8 = vsyncpa [#allocation5], 0
    %9 = vsyncpa [#allocation6], 0
    // Predicated region
    $region2: #{tpu_custom_call.1} parent=1 // pred_check
      _
    $region3: #{tpu_custom_call.1} parent=1 // pred_check_branch
      %11 = sbr.rel (0) target = $region5
    $region4: #{tpu_custom_call.1} parent=1 // pred_region
      %13 = vsyncadd [#allocation5], 0
      %s14 = sshll.u32 %s1, 4
      %s15 = int_to_ptr.hbm [resolvable:$true] %s14
      %s16 = sshll.u32 [#allocation4], 4
      %s17 = int_to_ptr.vmem [resolvable:$true] %s16
      %22 = dma.hbm_to_vmem [thread:$0]  %s15, 256, %s17, [#allocation5], 128, 128, 8
    $region5: #{tpu_custom_call.1} parent=1 // pred_fallthru
      _
    // Predicated region
    $region6: #{tpu_custom_call.1} parent=1 // pred_check
      _
    $region7: #{tpu_custom_call.1} parent=1 // pred_check_branch
      %24 = sbr.rel (0) target = $region9
    $region8: #{tpu_custom_call.1} parent=1 // pred_region
      %26 = dma.done [#allocation5], 256
    $region9: #{tpu_custom_call.1} parent=1 // pred_fallthru
      _
    %s27 = sld [smem:[#allocation3]]
    %v28 = vld [vmem:[#allocation4] sm:$0xff]
    %v29 = vld [vmem:[#allocation4 + $0x8] sm:$0xff]
    %v30 = vstv %s27
    %v31 = vmul.f32 %v30, %v28
    %v32 = vmul.f32 %v30, %v29
    %v33 = vtanh.pop %v31
    %v34 = vtanh.pop %v32
    %35 = vst [vmem:[#allocation7] sm:$0xff] %v33
    %36 = vst [vmem:[#allocation7 + $0x8] sm:$0xff] %v34
    // Predicated region
    $region10: #{tpu_custom_call.1} parent=1 // pred_check
      _
    $region11: #{tpu_custom_call.1} parent=1 // pred_check_branch
      %38 = sbr.rel (0) target = $region13
    $region12: #{tpu_custom_call.1} parent=1 // pred_region
      %40 = vsyncadd [#allocation6], 0
      %s41 = sshll.u32 [#allocation7], 4
      %s42 = int_to_ptr.vmem [resolvable:$true] %s41
      %s43 = sshll.u32 %s2, 4
      %s44 = int_to_ptr.hbm [resolvable:$true] %s43
      %49 = dma.vmem_to_hbm [thread:$0]  %s42, 256, %s44, [#allocation6], 128, 128, 8
    $region13: #{tpu_custom_call.1} parent=1 // pred_fallthru
      _
    // Predicated region
    $region14: #{tpu_custom_call.1} parent=1 // pred_check
      _
    $region15: #{tpu_custom_call.1} parent=1 // pred_check_branch
      %51 = sbr.rel (0) target = $region17
    $region16: #{tpu_custom_call.1} parent=1 // pred_region
      %53 = dma.done [#allocation6], 256
    $region17: #{tpu_custom_call.1} parent=1 // pred_fallthru
      _
    %54 = vsyncpa [#allocation5], 1
    %55 = vsyncpa [#allocation6], 1

</llo_original>
